<compile_context>
chip_gen: v7x
topology: tpu7x:2x2x1
jax: 0.10.0
libtpu: 0.0.40
codegen_flags: <defaults>
</compile_context>

<pallas_src>
import functools
import re

import jax
import jax.numpy as jnp
from jax.experimental import pallas as pl
from jax.experimental.pallas import tpu as pltpu


_LANE = 128
_TRANSCENDENTAL = {"tanh", "sigmoid", "gelu", "elu", "silu", "softplus", "mish", "selu"}


# ----------------------------------------------------------------------------
# Activation math (runs inside the kernel, on VMEM tiles).
# ----------------------------------------------------------------------------
def _apply_activation(x, name: str):
    if name == "relu":
        return jnp.maximum(x, jnp.zeros_like(x))
    if name == "relu6":
        # weak-typed integer bounds: no surprise float promotion on int inputs
        return jnp.clip(x, 0, 6)
    if name == "leaky_relu":
        return jax.nn.leaky_relu(x)
    if name == "tanh":
        return jnp.tanh(x)
    if name == "sigmoid":
        return jax.nn.sigmoid(x)
    if name == "gelu":
        # torch.nn.functional.gelu default: exact (erf-based) gelu
        return jax.nn.gelu(x, approximate=False)
    if name == "elu":
        return jax.nn.elu(x)
    if name == "silu":
        return jax.nn.silu(x)
    if name == "softplus":
        return jax.nn.softplus(x)
    if name == "selu":
        return jax.nn.selu(x)
    if name == "mish":
        return x * jnp.tanh(jax.nn.softplus(x))
    # TODO(synk): arbitrary user-supplied callables (the `Callable` branch of
    # Activation.__init__) cannot be lowered generically; only named torch
    # activations are supported inside the kernel.
    raise ValueError(f"Unsupported activation '{name}'")


# ----------------------------------------------------------------------------
# Pallas kernel: one (block_rows, cols) tile per grid step.
# ----------------------------------------------------------------------------
def _activation_kernel(x_ref, o_ref, *, name, compute_dtype):
    x = x_ref[...]
    if compute_dtype is not None:
        x = x.astype(compute_dtype)
    o_ref[...] = _apply_activation(x, name).astype(o_ref.dtype)


def _round_up(v, m):
    return ((v + m - 1) // m) * m


@functools.lru_cache(maxsize=1)
def _tpu_generation():
    """Best-effort TPU generation (5, 6, 7, ...) from the device kind string."""
    try:
        kind = str(jax.devices()[0].device_kind)
    except Exception:
        return 0
    m = re.search(r"v(\d+)", kind)
    return int(m.group(1)) if m else 0


def _default_block_bytes(gen: int) -> int:
    if gen >= 7:
        return 6 * 1024 * 1024   # 3.2 TB/s: amortize the ~0.35us/step overhead
    if gen == 6:
        return 4 * 1024 * 1024
    return 2 * 1024 * 1024       # v5e and unknown: bigger blocks buy little


def _choose_block_rows(rows, cols, sizing_itemsize, target_block_bytes, sub):
    """Pick block_rows: cap ~target_block_bytes, floor ~512 KiB, >=4 even steps."""
    if rows <= sub:
        return rows
    bytes_per_row = cols * sizing_itemsize
    floor_rows = max(sub, ((512 * 1024) // bytes_per_row) // sub * sub)
    cap_rows = max(floor_rows, (target_block_bytes // bytes_per_row) // sub * sub)
    min_steps = pl.cdiv(rows, cap_rows)           # forced by per-step byte cap
    max_steps = max(1, rows // floor_rows)        # allowed by per-step floor
    if max_steps < min_steps:
        max_steps = min_steps
    # >= 4 steps (>= 2 per v7x TensorCore so each core double-buffers), even.
    steps = min(max(min_steps, 4), max_steps)
    if steps > 1 and steps % 2:
        steps += 1
    if steps <= 1:
        return rows
    return min(rows, _round_up(pl.cdiv(rows, steps), sub))


def _run_rowwise(x2d, name, compute_dtype, target_block_bytes, inplace):
    """Run the elementwise kernel over a 2-D slab, tiling the row dimension."""
    rows, cols = x2d.shape
    dtype = x2d.dtype
    itemsize = jnp.dtype(dtype).itemsize
    compute_itemsize = 4 if compute_dtype is not None else itemsize
    # dtype-aware sublane alignment: f32 -> 8, bf16/f16 -> 16, int8/fp8 -> 32
    sub = {4: 8, 2: 16, 1: 32}.get(itemsize, 8)

    block_rows = _choose_block_rows(rows, cols, max(itemsize, compute_itemsize),
                                    target_block_bytes, sub)
    grid = (pl.cdiv(rows, block_rows),)

    # Explicit scoped-VMEM budget: double-buffered in + out blocks plus the
    # compute-dtype intermediate, with slack.  Counting compute-dtype bytes
    # matters on v5e where bf16 inputs are upcast to f32 in-kernel.
    block_io = block_rows * cols * itemsize
    block_comp = block_rows * cols * compute_itemsize
    need = 4 * block_io + 2 * block_comp + (2 << 20)
    gen = _tpu_generation()
    cap = (48 << 20) if gen >= 7 else (96 << 20)   # v7x has 64 MiB physical VMEM
    vmem_limit = int(min(max(need, 16 << 20), cap))

    n = rows * cols
    cost = pl.CostEstimate(
        flops=n,
        transcendentals=n if name in _TRANSCENDENTAL else 0,
        bytes_accessed=2 * n * itemsize,
    )

    return pl.pallas_call(
        functools.partial(_activation_kernel, name=name, compute_dtype=compute_dtype),
        out_shape=jax.ShapeDtypeStruct((rows, cols), dtype),
        grid_spec=pltpu.PrefetchScalarGridSpec(
            num_scalar_prefetch=0,
            grid=grid,
            in_specs=[pl.BlockSpec((block_rows, cols), lambda i: (i, 0))],
            out_specs=pl.BlockSpec((block_rows, cols), lambda i: (i, 0)),
        ),
        compiler_params=pltpu.CompilerParams(
            # Single parallel axis; if an xprof profile on v7x ever shows one
            # idle TensorCore, switch to pltpu.CORE_PARALLEL here.
            dimension_semantics=("parallel",),
            vmem_limit_bytes=vmem_limit,
        ),
        cost_estimate=cost,
        # Optional in-place aliasing (only when the caller no longer needs the
        # input); keeps HBM footprint at one buffer.
        input_output_aliases=({0: 0} if inplace else {}),
    )(x2d)


def pallas_activation(x, name: str = "relu", *, target_block_bytes: int = None,
                      inplace: bool = False):
    """Apply a named activation elementwise via a Pallas TPU kernel.

    Equivalent to `Activation(name)(x)` in the PyTorch module.
    """
    orig_shape = x.shape
    dtype = x.dtype
    n = x.size
    if n == 0:
        return x

    itemsize = jnp.dtype(dtype).itemsize
    gen = _tpu_generation()
    if target_block_bytes is None:
        target_block_bytes = _default_block_bytes(gen)

    # Compute dtype: f32 upcast for transcendentals on low-precision floats,
    # except bf16 on v6e/v7x which have native bf16 VPU/EUP paths (staying in
    # bf16 halves vreg/VMEM pressure there).
    upcast = (name in _TRANSCENDENTAL and jnp.issubdtype(dtype, jnp.floating)
              and itemsize < 4)
    if upcast and gen >= 6 and dtype == jnp.bfloat16:
        upcast = False
    compute_dtype = jnp.float32 if upcast else None

    flat = x.reshape(-1)   # copy-free view of the contiguous buffer

    if n % _LANE == 0:
        # Fast path: lane-dense slab, no padding, no extra HBM traffic.
        cols = next(c for c in (1024, 512, 256, 128) if n % c == 0)
        out = _run_rowwise(flat.reshape(n // cols, cols), name, compute_dtype,
                           target_block_bytes, inplace)
        return out.reshape(orig_shape)

    # ---- element count not a multiple of 128 -------------------------------
    n_main = (n // _LANE) * _LANE
    if n_main == 0:
        # Tiny array (< 128 elements): one full-extent block, no padding copy.
        out = _run_rowwise(flat.reshape(1, n), name, compute_dtype,
                           target_block_bytes, inplace)
        return out.reshape(orig_shape)

    # Lane-aligned prefix through the kernel; the (<128-element) tail is one
    # tiny jnp op.  This removes the full-array pad + unpad HBM round trips of
    # the previous version.
    # TODO(synk): a fully copy-free odd-size path would need an in-kernel
    # masked tail block (manual DMA over a raw HBM ref); not worth it here.
    cols = next(c for c in (1024, 512, 256, 128) if n_main % c == 0)
    main_out = _run_rowwise(flat[:n_main].reshape(n_main // cols, cols), name,
                            compute_dtype, target_block_bytes, False)
    tail = flat[n_main:]
    if compute_dtype is not None:
        tail = tail.astype(compute_dtype)
    tail_out = _apply_activation(tail, name).astype(dtype)
    return jnp.concatenate([main_out.reshape(-1), tail_out]).reshape(orig_shape)


# ----------------------------------------------------------------------------
# Module-like wrapper mirroring pygmalion's Activation.
# ----------------------------------------------------------------------------
class Activation:
    """JAX/Pallas analogue of pygmalion's Activation(torch.nn.Module)."""

    def __init__(self, activation):
        assert isinstance(activation, str) or callable(activation)
        if callable(activation) and not isinstance(activation, str):
            assert activation.__name__ != "<lambda>", \
                "Lambda function cannot be pickled and saved on disk"
        self.activation = activation

    def __repr__(self):
        name = (self.activation if isinstance(self.activation, str)
                else self.activation.__name__)
        return f"Activation({name})"

    def __call__(self, X):
        if isinstance(self.activation, str):
            return pallas_activation(X, self.activation)
        # TODO(synk): arbitrary user callables are applied directly (not lowered
        # to a Pallas kernel); only named activations run through the kernel.
        return self.activation(X)


if __name__ == "__main__":
    key = jax.random.PRNGKey(0)

    # NCHW-style input, as a conv layer would produce: batch=2, C=4, H=W=16.
    x = jax.random.normal(key, (2, 4, 16, 16), dtype=jnp.float32)

    act = Activation("relu")
    y = jax.block_until_ready(act(x))
    ref = jnp.maximum(x, 0.0)
    assert y.shape == x.shape and y.dtype == x.dtype
    assert jnp.allclose(y, ref, atol=1e-6), "mismatch vs reference relu"

    # Transcendental activation through the same kernel.
    y2 = jax.block_until_ready(Activation("tanh")(x))
    assert jnp.allclose(y2, jnp.tanh(x), atol=1e-5), "mismatch vs reference tanh"

    # Multi-row grid path (still small: 256 KiB).
    xb = jax.random.normal(jax.random.PRNGKey(1), (2, 8, 64, 64), dtype=jnp.float32)
    yb = jax.block_until_ready(Activation("gelu")(xb))
    assert jnp.allclose(yb, jax.nn.gelu(xb, approximate=False), atol=1e-5), \
        "mismatch vs reference gelu"

    # Tiny odd-size path (size not a multiple of 128) + bf16 handling.
    xr = jax.random.normal(jax.random.PRNGKey(2), (3, 5, 7), dtype=jnp.bfloat16)
    yr = jax.block_until_ready(Activation("sigmoid")(xr))
    assert yr.shape == xr.shape and yr.dtype == xr.dtype
    assert jnp.allclose(yr.astype(jnp.float32),
                        jax.nn.sigmoid(xr.astype(jnp.float32)),
                        atol=2e-2), "mismatch vs reference sigmoid (bf16)"

    # Prefix + tail path (>=128 elements, not a multiple of 128).
    xt = jax.random.normal(jax.random.PRNGKey(3), (257,), dtype=jnp.float32)
    yt = jax.block_until_ready(Activation("silu")(xt))
    assert yt.shape == xt.shape
    assert jnp.allclose(yt, jax.nn.silu(xt), atol=1e-5), "mismatch vs reference silu"

    # mish (previously listed but unimplemented).
    ym = jax.block_until_ready(Activation("mish")(x))
    ref_m = x * jnp.tanh(jax.nn.softplus(x))
    assert jnp.allclose(ym, ref_m, atol=1e-5), "mismatch vs reference mish"

    print("KERNEL_OK")
</pallas_src>

<mosaic_0001>
module attributes {stable_mosaic.version = 11 : i64} {
  func.func @_activation_kernel(%arg0: i32, %arg1: memref<2x1024xf32, #tpu.memory_space<vmem>>, %arg2: memref<2x1024xf32, #tpu.memory_space<vmem>>) attributes {dimension_semantics = [#tpu.dimension_semantics<parallel>], iteration_bounds = array<i64: 1>, scalar_prefetch = 0 : i64, scratch_operands = 0 : i64, tpu.core_type = #tpu.core_type<tc>, window_params = [{transform_indices = @transform_0, window_bounds = array<i64: 2, 1024>}, {transform_indices = @transform_1, window_bounds = array<i64: 2, 1024>}]} {
    %c0 = arith.constant 0 : index
    %c0_0 = arith.constant 0 : index
    %0 = vector.load %arg1[%c0, %c0_0] : memref<2x1024xf32, #tpu.memory_space<vmem>>, vector<2x1024xf32>
    %cst = arith.constant 0.000000e+00 : f32
    %1 = vector.broadcast %cst : f32 to vector<2x1024xf32>
    %2 = arith.maximumf %0, %1 : vector<2x1024xf32>
    %c0_1 = arith.constant 0 : index
    %c0_2 = arith.constant 0 : index
    %3 = vector.load %arg2[%c0_1, %c0_2] : memref<2x1024xf32, #tpu.memory_space<vmem>>, vector<2x1024xf32>
    tpu.vector_store %arg2[%c0_1, %c0_2], %2 {strides = array<i32>} : memref<2x1024xf32, #tpu.memory_space<vmem>>, vector<2x1024xf32>,
    return
  }
  func.func @transform_0(%arg0: i32) -> (i32, i32) {
    %c0_i32 = arith.constant 0 : i32
    %c0_i32_0 = arith.constant 0 : i32
    return %arg0, %c0_i32 : i32, i32
  }
  func.func @transform_1(%arg0: i32) -> (i32, i32) {
    %c0_i32 = arith.constant 0 : i32
    %c0_i32_0 = arith.constant 0 : i32
    return %arg0, %c0_i32 : i32, i32
  }
}

</mosaic_0001>

<llo_original>
// kernel: tpu_custom_call.1
$region0: #{tpu_custom_call.1}
  #allocation0 [shape = 'u32[]', space=smem, size = 0x4, offset = 0x4, fixed_abs, tag = 'smem constant byte address 0x4 - core index']
  #allocation1 [shape = 'u32[144,128]{1,0:T(1,128)}', space=vmem, size = 0x12000, scoped, tag = 'internal scratch']
  %s0 = inlined_call_operand.hbm [shape: f32[2,1024], index: 0, kind: input, shape index: {}]
  %s1 = inlined_call_operand.hbm [shape: f32[2,1024], index: 1, kind: output, shape index: {}]
  %s2 = sld [smem:[#allocation0]]
  $region18: #{tpu_custom_call.1} parent=0
    _
  %s4 = ssub.s32 1, %s2
  %s5 = scalar_select 0, %s4, %s2
  $region1: #{tpu_custom_call.1} parent=0
    #allocation2 [shape = 'u8[8192]{0}', space=vmem, size = 0x2000, scoped, tag = 'input window, operand 0, single buffered']
    #allocation3 [shape = 's32[1]{0}', space=sflag, size = 0x4, scoped, tag = 'scoped memory for tpu_custom_call.1']
    #allocation4 [shape = 's32[1]{0}', space=sflag, size = 0x4, scoped, tag = 'scoped memory for tpu_custom_call.1']
    #allocation5 [shape = 'u8[8192]{0}', space=vmem, size = 0x2000, scoped, tag = 'output window, operand 0, single buffered']
    %6 = vsyncpa [#allocation3], 0
    %7 = vsyncpa [#allocation4], 0
    // Predicated region
    $region2: #{tpu_custom_call.1} parent=1 // pred_check
      _
    $region3: #{tpu_custom_call.1} parent=1 // pred_check_branch
      %9 = sbr.rel (0) target = $region5
    $region4: #{tpu_custom_call.1} parent=1 // pred_region
      %s11 = ssub.s32 256, 256
      %12 = vsyncadd [#allocation3], %s11
      %s14 = sshll.u32 [#allocation2], 4
      %s15 = int_to_ptr.vmem [resolvable:$true] %s14
      %17 = dma.hbm_to_vmem [thread:$0]  %s0, 256, %s15, [#allocation3]
    $region5: #{tpu_custom_call.1} parent=1 // pred_fallthru
      _
    // Predicated region
    $region6: #{tpu_custom_call.1} parent=1 // pred_check
      _
    $region7: #{tpu_custom_call.1} parent=1 // pred_check_branch
      %19 = sbr.rel (0) target = $region9
    $region8: #{tpu_custom_call.1} parent=1 // pred_region
      %20 = dma.done [#allocation3], 256
    $region9: #{tpu_custom_call.1} parent=1 // pred_fallthru
      _
    %v21 = vld [vmem:[#allocation2] sm:$0xff]
    %v22 = vld [vmem:[#allocation2 + $0x8] sm:$0xff]
    %v23 = vmax.f32 %v21, 0.0
    %v24 = vmax.f32 %v22, 0.0
    %25 = vst [vmem:[#allocation5] sm:$0xff] %v23
    %26 = vst [vmem:[#allocation5 + $0x8] sm:$0xff] %v24
    // Predicated region
    $region10: #{tpu_custom_call.1} parent=1 // pred_check
      _
    $region11: #{tpu_custom_call.1} parent=1 // pred_check_branch
      %28 = sbr.rel (0) target = $region13
    $region12: #{tpu_custom_call.1} parent=1 // pred_region
      %s30 = ssub.s32 256, 256
      %31 = vsyncadd [#allocation4], %s30
      %s33 = sshll.u32 [#allocation5], 4
      %s34 = int_to_ptr.vmem [resolvable:$true] %s33
      %36 = dma.vmem_to_hbm [thread:$0]  %s34, 256, %s1, [#allocation4]
    $region13: #{tpu_custom_call.1} parent=1 // pred_fallthru
      _
    // Predicated region
    $region14: #{tpu_custom_call.1} parent=1 // pred_check
      _
    $region15: #{tpu_custom_call.1} parent=1 // pred_check_branch
      %38 = sbr.rel (0) target = $region17
    $region16: #{tpu_custom_call.1} parent=1 // pred_region
      %39 = dma.done [#allocation4], 256
    $region17: #{tpu_custom_call.1} parent=1 // pred_fallthru
      _
    %40 = vsyncpa [#allocation3], 1
    %41 = vsyncpa [#allocation4], 1

</llo_original>
